<compile_context>
chip_gen: v7x
topology: tpu7x:2x2x1
jax: 0.10.0
libtpu: 0.0.40
codegen_flags: <defaults>
</compile_context>

<pallas_src>
import numpy as np

import jax
import jax.numpy as jnp
from jax import lax
from jax.experimental import pallas as pl
from jax.experimental.pallas import tpu as pltpu


# ---------------------------------------------------------------------------
# Path 1: HBM DMA row gather (large tables).
# ---------------------------------------------------------------------------
def _dma_gather_kernel(ids_hbm, table_hbm, out_ref, ids_smem, ids_sem, row_sem):
    """One grid step gathers `tb` table rows straight into the output block.

    ids_hbm  : (N_pad,) int32 left in HBM (pl.ANY).
    table_hbm: (V, D) embedding table left in HBM (pl.ANY), never resident.
    out_ref  : (tb, D) VMEM output block for this grid step.
    ids_smem : (tb,) int32 SMEM scratch for this step's id chunk.
    ids_sem  : DMA semaphore for the id-chunk copy.
    row_sem  : single DMA semaphore shared by all tb row copies (byte-counted).
    """
    step = pl.program_id(0)
    tb = out_ref.shape[0]
    base = pl.multiple_of(step * tb, tb)

    # Fetch this step's (tb,) id chunk HBM -> SMEM (4*tb bytes).  No cross-step
    # prefetch: the grid axis is "parallel" (megacore may split steps across
    # TensorCores), so relying on step i-1 having prefetched step i's ids
    # would deadlock on the second core's first step.
    id_cp = pltpu.make_async_copy(ids_hbm.at[pl.ds(base, tb)], ids_smem, ids_sem)
    id_cp.start()
    id_cp.wait()

    # Issue tb row DMAs straight into the pipelined output block.  All copies
    # signal ONE shared DMA semaphore -> O(1) semaphore scratch at any tb,
    # while all tb row fetches stay in flight to hide HBM latency.
    def issue(j, carry):
        rid = ids_smem[j]
        pltpu.make_async_copy(
            table_hbm.at[pl.ds(rid, 1), :],
            out_ref.at[pl.ds(j, 1), :],
            row_sem,
        ).start()
        return carry

    lax.fori_loop(0, tb, issue, 0, unroll=8)

    # Drain: waits are byte-counted and every row copy has identical size, so
    # tb equal-sized waits on the shared semaphore consume exactly the tb
    # signals (most of this loop overlaps with DMAs still landing).
    def drain(j, carry):
        pltpu.make_async_copy(
            table_hbm.at[pl.ds(0, 1), :],
            out_ref.at[pl.ds(j, 1), :],
            row_sem,
        ).wait()
        return carry

    lax.fori_loop(0, tb, drain, 0, unroll=8)


def _hbm_gather_lookup(ids_pad: jax.Array, table: jax.Array, *, tb: int) -> jax.Array:
    n_pad = ids_pad.shape[0]
    v, d = table.shape
    itemsize = table.dtype.itemsize
    return pl.pallas_call(
        _dma_gather_kernel,
        out_shape=jax.ShapeDtypeStruct((n_pad, d), table.dtype),
        grid=(n_pad // tb,),
        in_specs=[
            pl.BlockSpec(memory_space=pl.ANY),   # ids stay in HBM (chunk-DMA'd)
            pl.BlockSpec(memory_space=pl.ANY),   # table stays in HBM
        ],
        out_specs=pl.BlockSpec((tb, d), lambda i: (i, 0)),
        scratch_shapes=[
            pltpu.SMEM((tb,), jnp.int32),        # this step's id chunk
            pltpu.SemaphoreType.DMA(()),         # id-chunk DMA sem
            pltpu.SemaphoreType.DMA(()),         # shared row-gather DMA sem
        ],
        compiler_params=pltpu.CompilerParams(
            # Output row blocks are independent -> shard across TCs on v7x;
            # harmless on single-TC v5e/v6e.  VMEM footprint is only the
            # double-buffered (tb, D) out block (<1 MiB), so the default
            # scoped VMEM limit is ample on every generation.
            dimension_semantics=("parallel",),
        ),
        cost_estimate=pl.CostEstimate(
            flops=0,
            transcendentals=0,
            bytes_accessed=2 * n_pad * d * itemsize + 2 * n_pad * 4,
        ),
    )(ids_pad, table)


# ---------------------------------------------------------------------------
# Path 2: VMEM-resident one-hot MXU gather (small tables).
# ---------------------------------------------------------------------------
def _onehot_gather_kernel(ids_ref, table_ref, out_ref):
    """out[j] = table[ids[j]] via a transposed one-hot matmul on the MXU.

    ids_ref  : (1, tb) int32 block (ids along the lane dim).
    table_ref: (V, D) whole table, VMEM resident (constant block index).
    out_ref  : (tb, D) output block.
    """
    v = table_ref.shape[0]
    tb = out_ref.shape[0]
    row_idx = lax.broadcasted_iota(jnp.int32, (v, tb), 0)           # table row id
    onehot_t = (row_idx == ids_ref[...]).astype(table_ref.dtype)    # (V, tb)
    out_ref[...] = lax.dot_general(
        onehot_t, table_ref[...],
        dimension_numbers=(((0,), (0,)), ((), ())),                 # contract V
        preferred_element_type=jnp.float32,
    ).astype(out_ref.dtype)


def _vmem_onehot_lookup(ids_pad: jax.Array, table: jax.Array, *, tb: int) -> jax.Array:
    n_pad = ids_pad.shape[0]
    v, d = table.shape
    itemsize = table.dtype.itemsize
    ids2d = ids_pad.reshape(1, n_pad)                                # lane-major ids
    return pl.pallas_call(
        _onehot_gather_kernel,
        out_shape=jax.ShapeDtypeStruct((n_pad, d), table.dtype),
        grid=(n_pad // tb,),
        in_specs=[
            pl.BlockSpec((1, tb), lambda i: (0, i)),    # id chunk (VMEM)
            pl.BlockSpec((v, d), lambda i: (0, 0)),     # whole table resident
        ],
        out_specs=pl.BlockSpec((tb, d), lambda i: (i, 0)),
        compiler_params=pltpu.CompilerParams(
            dimension_semantics=("parallel",),
        ),
        cost_estimate=pl.CostEstimate(
            flops=2 * n_pad * v * d,
            transcendentals=0,
            bytes_accessed=(n_pad * d + v * d) * itemsize + n_pad * 4,
        ),
    )(ids2d, table)


# ---------------------------------------------------------------------------
# Dispatch wrapper.
# ---------------------------------------------------------------------------
_SMALL_TABLE_MAX_ROWS = 2048                 # keeps the (V, tb) one-hot small
_SMALL_TABLE_MAX_BYTES = 4 * 1024 * 1024     # resident table fits scoped VMEM
                                             # on v5e/v6e (16/32 MiB) and v7x (32 MiB)


def embedding_lookup(ids: jax.Array, table: jax.Array, *, tb: int = 512) -> jax.Array:
    """Gather table[ids] with a Pallas TPU kernel.

    ids  : [N] integer ids (already offset into the concatenated table)
    table: [V, D] float table (row-concatenation of all tables)
    returns [N, D]
    """
    assert tb % 128 == 0, "tb must be a multiple of 128"
    n = ids.shape[0]
    v, d = table.shape
    n_pad = pl.cdiv(n, tb) * tb

    # Explicit OOB policy: clamp like jnp.take / fused TBE (TPU DMA OOB is
    # unchecked, so a bad id must never reach the kernel).  Pad ids are 0.
    ids_pad = jnp.pad(ids.astype(jnp.int32), (0, n_pad - n))
    ids_pad = jnp.clip(ids_pad, 0, v - 1)

    if v <= _SMALL_TABLE_MAX_ROWS and v * d * table.dtype.itemsize <= _SMALL_TABLE_MAX_BYTES:
        out = _vmem_onehot_lookup(ids_pad, table, tb=tb)
    else:
        out = _hbm_gather_lookup(ids_pad, table, tb=tb)
    return out[:n]


# ---------------------------------------------------------------------------
# JAX-side module mirroring DataParallelEmbeddingCollection.
# ---------------------------------------------------------------------------
class DataParallelEmbeddingCollectionJAX:
    """Data-parallel (fully replicated / DENSE kernel) embedding collection.

    table_configs: list of (table_name, num_embeddings, embedding_dim,
                            feature_names).  All tables share embedding_dim.
    """
    # TODO(synk): torchrec sharding plumbing (ShardingEnv / process groups /
    # fused optimizer kwargs) has no Pallas equivalent; tables are simply
    # replicated on the single device here.

    def __init__(self, table_configs, key):
        dims = {d for (_, _, d, _) in table_configs}
        assert len(dims) == 1, "EmbeddingCollection requires a single embedding_dim"
        self._embedding_dim = dims.pop()
        self._table_names = [name for (name, _, _, _) in table_configs]
        self._feature_names = [f for (_, _, _, feats) in table_configs for f in feats]

        # reset_parameters(): deterministic uniform init per table
        # (mirrors torchrec's default uniform(-1/sqrt(n), 1/sqrt(n)) init_fn).
        tables = []
        feat_to_offset = {}
        row_offset = 0
        for (name, num_emb, dim, feats) in table_configs:
            key, sub = jax.random.split(key)
            bound = 1.0 / float(np.sqrt(num_emb))
            w = jax.random.uniform(
                sub, (num_emb, dim), jnp.float32, minval=-bound, maxval=bound
            )
            tables.append(w)
            for f in feats:
                feat_to_offset[f] = row_offset
            row_offset += num_emb

        # Fused-TBE style: one concatenated weight blob for all tables.
        self._weights = jnp.concatenate(tables, axis=0)      # [V_total, D]
        self._feat_to_offset = feat_to_offset
        self._features_order = None       # lazily built, like _has_uninitialized_input_dist
        self._cached_input_keys = None    # re-derived if key order changes

    def _create_input_dist(self, input_feature_names):
        order = [input_feature_names.index(f) for f in self._feature_names]
        self._features_order = [] if order == list(range(len(order))) else order
        self._cached_input_keys = list(input_feature_names)

    def forward(self, keys, values, lengths):
        """features = KJT(keys, values, lengths).

        keys   : list[str], len F
        values : int32 [N]  (ids, feature-major: all of keys[0], then keys[1], ...)
        lengths: int32 [F, B]
        returns: dict feature_name -> {"values": [n_f, D] f32, "lengths": [B] int32}
        """
        keys = list(keys)
        if self._features_order is None or self._cached_input_keys != keys:
            self._create_input_dist(keys)

        # One host sync for all per-feature sizes (needed anyway to produce
        # the per-feature jagged split of the result).
        sizes_np = np.asarray(jax.device_get(lengths)).sum(axis=1).astype(np.int64)
        seg_starts = np.concatenate([np.zeros((1,), np.int64), np.cumsum(sizes_np)])

        # features.permute(self._features_order) -- reorder per-feature segments.
        order = self._features_order if self._features_order else list(range(len(keys)))
        perm_keys = [keys[i] for i in order]
        perm_sizes = [int(sizes_np[i]) for i in order]
        if self._features_order:
            perm_values = jnp.concatenate(
                [values[int(seg_starts[i]):int(seg_starts[i + 1])] for i in order],
                axis=0,
            )
            perm_lengths = lengths[jnp.asarray(order, jnp.int32)]
        else:
            perm_values = values
            perm_lengths = lengths

        # Fused lookup: per-id table row offsets built on-device in one
        # jnp.repeat (no host->device transfer of an N-sized array), then a
        # single Pallas gather over the concatenated table.
        n_perm = int(sum(perm_sizes))
        feat_offsets = jnp.asarray(
            [self._feat_to_offset[k] for k in perm_keys], jnp.int32
        )
        per_id_offsets = jnp.repeat(
            feat_offsets, jnp.asarray(perm_sizes, jnp.int32), total_repeat_length=n_perm
        )
        global_ids = perm_values.astype(jnp.int32) + per_id_offsets

        # embeddings = self._dp_lookups[0](features).view(-1, embedding_dim)
        embeddings = embedding_lookup(global_ids, self._weights)   # [N, D] (Pallas)

        # KeyedJaggedTensor(values=embeddings, keys, lengths).to_dict()
        out = {}
        start = 0
        for i, k in enumerate(perm_keys):
            n_f = perm_sizes[i]
            out[k] = {
                "values": embeddings[start:start + n_f],   # [n_f, D]
                "lengths": perm_lengths[i],                # [B]
            }
            start += n_f
        return out


# ---------------------------------------------------------------------------
if __name__ == "__main__":
    key = jax.random.PRNGKey(0)

    # ---- Test 1: module forward (small tables -> VMEM one-hot fast path) ----
    table_configs = [
        ("table_0", 64, 32, ["f0", "f1"]),
        ("table_1", 48, 32, ["f2"]),
    ]
    key, mkey = jax.random.split(key)
    module = DataParallelEmbeddingCollectionJAX(table_configs, mkey)

    keys_ = ["f0", "f1", "f2"]
    lengths = jnp.array([[3, 2], [1, 4], [2, 3]], dtype=jnp.int32)  # [F, B]
    n_total = int(lengths.sum())                                    # 15 ids
    n_f01 = int(lengths[0].sum() + lengths[1].sum())
    n_f2 = int(lengths[2].sum())
    key, vk = jax.random.split(key)
    ids_f01 = jax.random.randint(vk, (n_f01,), 0, 64)
    key, vk2 = jax.random.split(key)
    ids_f2 = jax.random.randint(vk2, (n_f2,), 0, 48)
    values = jnp.concatenate([ids_f01, ids_f2]).astype(jnp.int32)   # [15]

    result = module.forward(keys_, values, lengths)
    jax.block_until_ready(result)

    offsets = jnp.concatenate(
        [jnp.zeros((n_f01,), jnp.int32), jnp.full((n_f2,), 64, jnp.int32)]
    )
    ref = jnp.take(module._weights, values + offsets, axis=0)
    got = jnp.concatenate([result[k]["values"] for k in keys_], axis=0)
    assert got.shape == (n_total, 32), got.shape
    assert jnp.allclose(got, ref, atol=1e-6, rtol=1e-6), "mismatch vs reference gather"
    for i, k in enumerate(keys_):
        assert result[k]["values"].shape == (int(lengths[i].sum()), 32)
        assert result[k]["lengths"].shape == (2,)

    # ---- Test 2: large table -> HBM DMA row-gather path (multi-step grid) ----
    key, tk, ik = jax.random.split(key, 3)
    big_v, big_d = 32768, 64                     # 8 MiB f32 > fast-path budget
    big_table = jax.random.normal(tk, (big_v, big_d), jnp.float32)
    big_ids = jax.random.randint(ik, (3000,), 0, big_v, dtype=jnp.int32)
    got_big = embedding_lookup(big_ids, big_table)           # tb=512 -> 6 grid steps
    jax.block_until_ready(got_big)
    ref_big = jnp.take(big_table, big_ids, axis=0)
    assert got_big.shape == (3000, big_d), got_big.shape
    assert jnp.array_equal(got_big, ref_big), "DMA gather mismatch vs jnp.take"

    print("KERNEL_OK")
</pallas_src>

<mosaic_0001>
module attributes {stable_mosaic.version = 11 : i64} {
  func.func @_onehot_gather_kernel(%arg0: i32, %arg1: memref<1x512xi32, #tpu.memory_space<vmem>>, %arg2: memref<112x32xf32, #tpu.memory_space<vmem>>, %arg3: memref<512x32xf32, #tpu.memory_space<vmem>>) attributes {dimension_semantics = [#tpu.dimension_semantics<parallel>], iteration_bounds = array<i64: 1>, scalar_prefetch = 0 : i64, scratch_operands = 0 : i64, tpu.core_type = #tpu.core_type<tc>, window_params = [{transform_indices = @transform_0, window_bounds = array<i64: 1, 512>}, {pipeline_mode = #tpu.pipeline_mode<synchronous>, transform_indices = @transform_1, window_bounds = array<i64: 112, 32>}, {transform_indices = @transform_2, window_bounds = array<i64: 512, 32>}]} {
    %0 = tpu.iota {dimensions = array<i32: 0>} : vector<112x512xi32>
    %c0 = arith.constant 0 : index
    %c0_0 = arith.constant 0 : index
    %1 = vector.load %arg1[%c0, %c0_0] : memref<1x512xi32, #tpu.memory_space<vmem>>, vector<1x512xi32>
    %2 = vector.broadcast %1 : vector<1x512xi32> to vector<112x512xi32>
    %3 = arith.cmpi eq, %0, %2 : vector<112x512xi32>
    %4 = arith.extui %3 : vector<112x512xi1> to vector<112x512xi32>
    %5 = arith.sitofp %4 : vector<112x512xi32> to vector<112x512xf32>
    %c0_1 = arith.constant 0 : index
    %c0_2 = arith.constant 0 : index
    %6 = vector.load %arg2[%c0_1, %c0_2] : memref<112x32xf32, #tpu.memory_space<vmem>>, vector<112x32xf32>
    %cst = arith.constant dense<0.000000e+00> : vector<512x32xf32>
    %7 = tpu.matmul %5, %6, %cst {dimension_numbers = #tpu.dot_dimension_numbers<[0], [0], [1], [1], [0, 1, 1, 1], [], []>} : vector<112x512xf32>, vector<112x32xf32>, vector<512x32xf32> -> vector<512x32xf32>
    %c0_3 = arith.constant 0 : index
    %c0_4 = arith.constant 0 : index
    %8 = vector.load %arg3[%c0_3, %c0_4] : memref<512x32xf32, #tpu.memory_space<vmem>>, vector<512x32xf32>
    tpu.vector_store %arg3[%c0_3, %c0_4], %7 {strides = array<i32>} : memref<512x32xf32, #tpu.memory_space<vmem>>, vector<512x32xf32>,
    return
  }
  func.func @transform_0(%arg0: i32) -> (i32, i32) {
    %c0_i32 = arith.constant 0 : i32
    %c0_i32_0 = arith.constant 0 : i32
    return %c0_i32, %arg0 : i32, i32
  }
  func.func @transform_1(%arg0: i32) -> (i32, i32) {
    %c0_i32 = arith.constant 0 : i32
    %c0_i32_0 = arith.constant 0 : i32
    %c0_i32_1 = arith.constant 0 : i32
    return %c0_i32, %c0_i32_0 : i32, i32
  }
  func.func @transform_2(%arg0: i32) -> (i32, i32) {
    %c0_i32 = arith.constant 0 : i32
    %c0_i32_0 = arith.constant 0 : i32
    return %arg0, %c0_i32 : i32, i32
  }
}

</mosaic_0001>

<llo_original>
// kernel: tpu_custom_call.1
$region0: #{tpu_custom_call.1}
  #allocation0 [shape = 'u32[]', space=smem, size = 0x4, offset = 0x4, fixed_abs, tag = 'smem constant byte address 0x4 - core index']
  #allocation1 [shape = 'u32[144,128]{1,0:T(1,128)}', space=vmem, size = 0x12000, scoped, tag = 'internal scratch']
  %s0 = inlined_call_operand.vmem [shape: s32[1,512], index: 0, kind: input, shape index: {}]
  %s1 = inlined_call_operand.vmem [shape: f32[112,32], index: 1, kind: input, shape index: {}]
  %s2 = inlined_call_operand.vmem [shape: f32[512,32], index: 2, kind: output, shape index: {}]
  %s3 = sld [smem:[#allocation0]]
  $region18: #{tpu_custom_call.1} parent=0
    _
  %s5 = ssub.s32 1, %s3
  %s6 = scalar_select 0, %s5, %s3
  // Predicated region
  $region2: #{tpu_custom_call.1} parent=0 // pred_check
    _
  $region3: #{tpu_custom_call.1} parent=0 // pred_check_branch
    %8 = sbr.rel (0) target = $region5
  $region4: #{tpu_custom_call.1} parent=0 // pred_region
    _
  $region5: #{tpu_custom_call.1} parent=0 // pred_fallthru
    _
  // Predicated region
  $region6: #{tpu_custom_call.1} parent=0 // pred_check
    _
  $region7: #{tpu_custom_call.1} parent=0 // pred_check_branch
    %10 = sbr.rel (0) target = $region9
  $region8: #{tpu_custom_call.1} parent=0 // pred_region
    _
  $region9: #{tpu_custom_call.1} parent=0 // pred_fallthru
    _
  %v11 = vlaneseq
  %v12 = vshrl.u32 %v11, 7
  %v13 = vadd.s32 %v12, 8
  %v14 = vadd.s32 %v12, 16
  %v15 = vadd.s32 %v12, 24
  %v16 = vadd.s32 %v12, 32
  %v17 = vadd.s32 %v12, 40
  %v18 = vadd.s32 %v12, 48
  %v19 = vadd.s32 %v12, 56
  %v20 = vadd.s32 %v12, 64
  %v21 = vadd.s32 %v12, 72
  %v22 = vadd.s32 %v12, 80
  %v23 = vadd.s32 %v12, 88
  %v24 = vadd.s32 %v12, 96
  %v25 = vadd.s32 %v12, 104
  %v26 = vld [vmem:[%s0] sm:$0xf]
  %v27 = vlaneseq
  %v28 = vshrl.u32 %v27, 7
  %v29 = vsub.s32 0, %v28
  %v30 = vrot.slane %v26, %v29
  %v31 = vlaneseq
  %v32 = vshrl.u32 %v31, 7
  %v33 = vsub.s32 1, %v32
  %v34 = vrot.slane %v26, %v33
  %v35 = vlaneseq
  %v36 = vshrl.u32 %v35, 7
  %v37 = vsub.s32 2, %v36
  %v38 = vrot.slane %v26, %v37
  %v39 = vlaneseq
  %v40 = vshrl.u32 %v39, 7
  %v41 = vsub.s32 3, %v40
  %v42 = vrot.slane %v26, %v41
  %vm43 = vcmp.eq.s32.totalorder %v12, %v30
  %vm44 = vcmp.eq.s32.totalorder %v12, %v34
  %vm45 = vcmp.eq.s32.totalorder %v12, %v38
  %vm46 = vcmp.eq.s32.totalorder %v12, %v42
  %vm47 = vcmp.eq.s32.totalorder %v13, %v30
  %vm48 = vcmp.eq.s32.totalorder %v13, %v34
  %vm49 = vcmp.eq.s32.totalorder %v13, %v38
  %vm50 = vcmp.eq.s32.totalorder %v13, %v42
  %vm51 = vcmp.eq.s32.totalorder %v14, %v30
  %vm52 = vcmp.eq.s32.totalorder %v14, %v34
  %vm53 = vcmp.eq.s32.totalorder %v14, %v38
  %vm54 = vcmp.eq.s32.totalorder %v14, %v42
  %vm55 = vcmp.eq.s32.totalorder %v15, %v30
  %vm56 = vcmp.eq.s32.totalorder %v15, %v34
  %vm57 = vcmp.eq.s32.totalorder %v15, %v38
  %vm58 = vcmp.eq.s32.totalorder %v15, %v42
  %vm59 = vcmp.eq.s32.totalorder %v16, %v30
  %vm60 = vcmp.eq.s32.totalorder %v16, %v34
  %vm61 = vcmp.eq.s32.totalorder %v16, %v38
  %vm62 = vcmp.eq.s32.totalorder %v16, %v42
  %vm63 = vcmp.eq.s32.totalorder %v17, %v30
  %vm64 = vcmp.eq.s32.totalorder %v17, %v34
  %vm65 = vcmp.eq.s32.totalorder %v17, %v38
  %vm66 = vcmp.eq.s32.totalorder %v17, %v42
  %vm67 = vcmp.eq.s32.totalorder %v18, %v30
  %vm68 = vcmp.eq.s32.totalorder %v18, %v34
  %vm69 = vcmp.eq.s32.totalorder %v18, %v38
  %vm70 = vcmp.eq.s32.totalorder %v18, %v42
  %vm71 = vcmp.eq.s32.totalorder %v19, %v30
  %vm72 = vcmp.eq.s32.totalorder %v19, %v34
  %vm73 = vcmp.eq.s32.totalorder %v19, %v38
  %vm74 = vcmp.eq.s32.totalorder %v19, %v42
  %vm75 = vcmp.eq.s32.totalorder %v20, %v30
  %vm76 = vcmp.eq.s32.totalorder %v20, %v34
  %vm77 = vcmp.eq.s32.totalorder %v20, %v38
  %vm78 = vcmp.eq.s32.totalorder %v20, %v42
  %vm79 = vcmp.eq.s32.totalorder %v21, %v30
  %vm80 = vcmp.eq.s32.totalorder %v21, %v34
  %vm81 = vcmp.eq.s32.totalorder %v21, %v38
  %vm82 = vcmp.eq.s32.totalorder %v21, %v42
  %vm83 = vcmp.eq.s32.totalorder %v22, %v30
  %vm84 = vcmp.eq.s32.totalorder %v22, %v34
  %vm85 = vcmp.eq.s32.totalorder %v22, %v38
  %vm86 = vcmp.eq.s32.totalorder %v22, %v42
  %vm87 = vcmp.eq.s32.totalorder %v23, %v30
  %vm88 = vcmp.eq.s32.totalorder %v23, %v34
  %vm89 = vcmp.eq.s32.totalorder %v23, %v38
  %vm90 = vcmp.eq.s32.totalorder %v23, %v42
  %vm91 = vcmp.eq.s32.totalorder %v24, %v30
  %vm92 = vcmp.eq.s32.totalorder %v24, %v34
  %vm93 = vcmp.eq.s32.totalorder %v24, %v38
  %vm94 = vcmp.eq.s32.totalorder %v24, %v42
  %vm95 = vcmp.eq.s32.totalorder %v25, %v30
  %vm96 = vcmp.eq.s32.totalorder %v25, %v34
  %vm97 = vcmp.eq.s32.totalorder %v25, %v38
  %vm98 = vcmp.eq.s32.totalorder %v25, %v42
  %v99 = vsel %vm43, 1, 0
  %v100 = vsel %vm44, 1, 0
  %v101 = vsel %vm45, 1, 0
  %v102 = vsel %vm46, 1, 0
  %v103 = vsel %vm47, 1, 0
  %v104 = vsel %vm48, 1, 0
  %v105 = vsel %vm49, 1, 0
  %v106 = vsel %vm50, 1, 0
  %v107 = vsel %vm51, 1, 0
  %v108 = vsel %vm52, 1, 0
  %v109 = vsel %vm53, 1, 0
  %v110 = vsel %vm54, 1, 0
  %v111 = vsel %vm55, 1, 0
  %v112 = vsel %vm56, 1, 0
  %v113 = vsel %vm57, 1, 0
  %v114 = vsel %vm58, 1, 0
  %v115 = vsel %vm59, 1, 0
  %v116 = vsel %vm60, 1, 0
  %v117 = vsel %vm61, 1, 0
  %v118 = vsel %vm62, 1, 0
  %v119 = vsel %vm63, 1, 0
  %v120 = vsel %vm64, 1, 0
  %v121 = vsel %vm65, 1, 0
  %v122 = vsel %vm66, 1, 0
  %v123 = vsel %vm67, 1, 0
  %v124 = vsel %vm68, 1, 0
  %v125 = vsel %vm69, 1, 0
  %v126 = vsel %vm70, 1, 0
  %v127 = vsel %vm71, 1, 0
  %v128 = vsel %vm72, 1, 0
  %v129 = vsel %vm73, 1, 0
  %v130 = vsel %vm74, 1, 0
  %v131 = vsel %vm75, 1, 0
  %v132 = vsel %vm76, 1, 0
  %v133 = vsel %vm77, 1, 0
  %v134 = vsel %vm78, 1, 0
  %v135 = vsel %vm79, 1, 0
  %v136 = vsel %vm80, 1, 0
  %v137 = vsel %vm81, 1, 0
  %v138 = vsel %vm82, 1, 0
  %v139 = vsel %vm83, 1, 0
  %v140 = vsel %vm84, 1, 0
  %v141 = vsel %vm85, 1, 0
  %v142 = vsel %vm86, 1, 0
  %v143 = vsel %vm87, 1, 0
  %v144 = vsel %vm88, 1, 0
  %v145 = vsel %vm89, 1, 0
  %v146 = vsel %vm90, 1, 0
  %v147 = vsel %vm91, 1, 0
  %v148 = vsel %vm92, 1, 0
  %v149 = vsel %vm93, 1, 0
  %v150 = vsel %vm94, 1, 0
  %v151 = vsel %vm95, 1, 0
  %v152 = vsel %vm96, 1, 0
  %v153 = vsel %vm97, 1, 0
  %v154 = vsel %vm98, 1, 0
  %v155 = vcvt.s32.f32 %v99
  %v156 = vcvt.s32.f32 %v100
  %v157 = vcvt.s32.f32 %v101
  %v158 = vcvt.s32.f32 %v102
  %v159 = vcvt.s32.f32 %v103
  %v160 = vcvt.s32.f32 %v104
  %v161 = vcvt.s32.f32 %v105
  %v162 = vcvt.s32.f32 %v106
  %v163 = vcvt.s32.f32 %v107
  %v164 = vcvt.s32.f32 %v108
  %v165 = vcvt.s32.f32 %v109
  %v166 = vcvt.s32.f32 %v110
  %v167 = vcvt.s32.f32 %v111
  %v168 = vcvt.s32.f32 %v112
  %v169 = vcvt.s32.f32 %v113
  %v170 = vcvt.s32.f32 %v114
  %v171 = vcvt.s32.f32 %v115
  %v172 = vcvt.s32.f32 %v116
  %v173 = vcvt.s32.f32 %v117
  %v174 = vcvt.s32.f32 %v118
  %v175 = vcvt.s32.f32 %v119
  %v176 = vcvt.s32.f32 %v120
  %v177 = vcvt.s32.f32 %v121
  %v178 = vcvt.s32.f32 %v122
  %v179 = vcvt.s32.f32 %v123
  %v180 = vcvt.s32.f32 %v124
  %v181 = vcvt.s32.f32 %v125
  %v182 = vcvt.s32.f32 %v126
  %v183 = vcvt.s32.f32 %v127
  %v184 = vcvt.s32.f32 %v128
  %v185 = vcvt.s32.f32 %v129
  %v186 = vcvt.s32.f32 %v130
  %v187 = vcvt.s32.f32 %v131
  %v188 = vcvt.s32.f32 %v132
  %v189 = vcvt.s32.f32 %v133
  %v190 = vcvt.s32.f32 %v134
  %v191 = vcvt.s32.f32 %v135
  %v192 = vcvt.s32.f32 %v136
  %v193 = vcvt.s32.f32 %v137
  %v194 = vcvt.s32.f32 %v138
  %v195 = vcvt.s32.f32 %v139
  %v196 = vcvt.s32.f32 %v140
  %v197 = vcvt.s32.f32 %v141
  %v198 = vcvt.s32.f32 %v142
  %v199 = vcvt.s32.f32 %v143
  %v200 = vcvt.s32.f32 %v144
  %v201 = vcvt.s32.f32 %v145
  %v202 = vcvt.s32.f32 %v146
  %v203 = vcvt.s32.f32 %v147
  %v204 = vcvt.s32.f32 %v148
  %v205 = vcvt.s32.f32 %v149
  %v206 = vcvt.s32.f32 %v150
  %v207 = vcvt.s32.f32 %v151
  %v208 = vcvt.s32.f32 %v152
  %v209 = vcvt.s32.f32 %v153
  %v210 = vcvt.s32.f32 %v154
  %v211 = vld [vmem:[%s1] sm:$0xff]
  %v212 = vld [vmem:[%s1 + $0x8] sm:$0xff]
  %v213 = vld [vmem:[%s1 + $0x10] sm:$0xff]
  %v214 = vld [vmem:[%s1 + $0x18] sm:$0xff]
  %v215 = vld [vmem:[%s1 + $0x20] sm:$0xff]
  %v216 = vld [vmem:[%s1 + $0x28] sm:$0xff]
  %v217 = vld [vmem:[%s1 + $0x30] sm:$0xff]
  %v218 = vld [vmem:[%s1 + $0x38] sm:$0xff]
  %v219 = vld [vmem:[%s1 + $0x40] sm:$0xff]
  %v220 = vld [vmem:[%s1 + $0x48] sm:$0xff]
  %v221 = vld [vmem:[%s1 + $0x50] sm:$0xff]
  %v222 = vld [vmem:[%s1 + $0x58] sm:$0xff]
  %v223 = vld [vmem:[%s1 + $0x60] sm:$0xff]
  %v224 = vld [vmem:[%s1 + $0x68] sm:$0xff]
  %225 = vxpose.xlu0.b32.start [1/16] %v155, 128
  %226 = vxpose.xlu0.b32.cont [2/16] %v159, 128
  %227 = vxpose.xlu0.b32.cont [3/16] %v163, 128
  %228 = vxpose.xlu0.b32.cont [4/16] %v167, 128
  %229 = vxpose.xlu0.b32.cont [5/16] %v171, 128
  %230 = vxpose.xlu0.b32.cont [6/16] %v175, 128
  %231 = vxpose.xlu0.b32.cont [7/16] %v179, 128
  %232 = vxpose.xlu0.b32.cont [8/16] %v183, 128
  %233 = vxpose.xlu0.b32.cont [9/16] %v187, 128
  %234 = vxpose.xlu0.b32.cont [10/16] %v191, 128
  %235 = vxpose.xlu0.b32.cont [11/16] %v195, 128
  %236 = vxpose.xlu0.b32.cont [12/16] %v199, 128
  %237 = vxpose.xlu0.b32.cont [13/16] %v203, 128
  %238 = vxpose.xlu0.b32.cont [14/16] %v207, 128
  %239 = vxpose.xlu0.b32.cont [15/16] 0.0, 128
  %240 = vxpose.xlu0.b32.end [16/16] 0.0, 128
  %v241 = vpop.trf.xlu0
  %v242 = vpop.trf.xlu0
  %v243 = vpop.trf.xlu0
  %v244 = vpop.trf.xlu0
  %v245 = vpop.trf.xlu0
  %v246 = vpop.trf.xlu0
  %v247 = vpop.trf.xlu0
  %v248 = vpop.trf.xlu0
  %v249 = vpop.trf.xlu0
  %v250 = vpop.trf.xlu0
  %v251 = vpop.trf.xlu0
  %v252 = vpop.trf.xlu0
  %v253 = vpop.trf.xlu0
  %v254 = vpop.trf.xlu0
  %v255 = vpop.trf.xlu0
  %v256 = vpop.trf.xlu0
  %257 = vxpose.xlu0.b32.start [1/16] %v156, 128
  %258 = vxpose.xlu0.b32.cont [2/16] %v160, 128
  %259 = vxpose.xlu0.b32.cont [3/16] %v164, 128
  %260 = vxpose.xlu0.b32.cont [4/16] %v168, 128
  %261 = vxpose.xlu0.b32.cont [5/16] %v172, 128
  %262 = vxpose.xlu0.b32.cont [6/16] %v176, 128
  %263 = vxpose.xlu0.b32.cont [7/16] %v180, 128
  %264 = vxpose.xlu0.b32.cont [8/16] %v184, 128
  %265 = vxpose.xlu0.b32.cont [9/16] %v188, 128
  %266 = vxpose.xlu0.b32.cont [10/16] %v192, 128
  %267 = vxpose.xlu0.b32.cont [11/16] %v196, 128
  %268 = vxpose.xlu0.b32.cont [12/16] %v200, 128
  %269 = vxpose.xlu0.b32.cont [13/16] %v204, 128
  %270 = vxpose.xlu0.b32.cont [14/16] %v208, 128
  %271 = vxpose.xlu0.b32.cont [15/16] 0.0, 128
  %272 = vxpose.xlu0.b32.end [16/16] 0.0, 128
  %v273 = vpop.trf.xlu0
  %v274 = vpop.trf.xlu0
  %v275 = vpop.trf.xlu0
  %v276 = vpop.trf.xlu0
  %v277 = vpop.trf.xlu0
  %v278 = vpop.trf.xlu0
  %v279 = vpop.trf.xlu0
  %v280 = vpop.trf.xlu0
  %v281 = vpop.trf.xlu0
  %v282 = vpop.trf.xlu0
  %v283 = vpop.trf.xlu0
  %v284 = vpop.trf.xlu0
  %v285 = vpop.trf.xlu0
  %v286 = vpop.trf.xlu0
  %v287 = vpop.trf.xlu0
  %v288 = vpop.trf.xlu0
  %289 = vxpose.xlu0.b32.start [1/16] %v157, 128
  %290 = vxpose.xlu0.b32.cont [2/16] %v161, 128
  %291 = vxpose.xlu0.b32.cont [3/16] %v165, 128
  %292 = vxpose.xlu0.b32.cont [4/16] %v169, 128
  %293 = vxpose.xlu0.b32.cont [5/16] %v173, 128
  %294 = vxpose.xlu0.b32.cont [6/16] %v177, 128
  %295 = vxpose.xlu0.b32.cont [7/16] %v181, 128
  %296 = vxpose.xlu0.b32.cont [8/16] %v185, 128
  %297 = vxpose.xlu0.b32.cont [9/16] %v189, 128
  %298 = vxpose.xlu0.b32.cont [10/16] %v193, 128
  %299 = vxpose.xlu0.b32.cont [11/16] %v197, 128
  %300 = vxpose.xlu0.b32.cont [12/16] %v201, 128
  %301 = vxpose.xlu0.b32.cont [13/16] %v205, 128
  %302 = vxpose.xlu0.b32.cont [14/16] %v209, 128
  %303 = vxpose.xlu0.b32.cont [15/16] 0.0, 128
  %304 = vxpose.xlu0.b32.end [16/16] 0.0, 128
  %v305 = vpop.trf.xlu0
  %v306 = vpop.trf.xlu0
  %v307 = vpop.trf.xlu0
  %v308 = vpop.trf.xlu0
  %v309 = vpop.trf.xlu0
  %v310 = vpop.trf.xlu0
  %v311 = vpop.trf.xlu0
  %v312 = vpop.trf.xlu0
  %v313 = vpop.trf.xlu0
  %v314 = vpop.trf.xlu0
  %v315 = vpop.trf.xlu0
  %v316 = vpop.trf.xlu0
  %v317 = vpop.trf.xlu0
  %v318 = vpop.trf.xlu0
  %v319 = vpop.trf.xlu0
  %v320 = vpop.trf.xlu0
  %321 = vxpose.xlu0.b32.start [1/16] %v158, 128
  %322 = vxpose.xlu0.b32.cont [2/16] %v162, 128
  %323 = vxpose.xlu0.b32.cont [3/16] %v166, 128
  %324 = vxpose.xlu0.b32.cont [4/16] %v170, 128
  %325 = vxpose.xlu0.b32.cont [5/16] %v174, 128
  %326 = vxpose.xlu0.b32.cont [6/16] %v178, 128
  %327 = vxpose.xlu0.b32.cont [7/16] %v182, 128
  %328 = vxpose.xlu0.b32.cont [8/16] %v186, 128
  %329 = vxpose.xlu0.b32.cont [9/16] %v190, 128
  %330 = vxpose.xlu0.b32.cont [10/16] %v194, 128
  %331 = vxpose.xlu0.b32.cont [11/16] %v198, 128
  %332 = vxpose.xlu0.b32.cont [12/16] %v202, 128
  %333 = vxpose.xlu0.b32.cont [13/16] %v206, 128
  %334 = vxpose.xlu0.b32.cont [14/16] %v210, 128
  %335 = vxpose.xlu0.b32.cont [15/16] 0.0, 128
  %336 = vxpose.xlu0.b32.end [16/16] 0.0, 128
  %v337 = vpop.trf.xlu0
  %v338 = vpop.trf.xlu0
  %v339 = vpop.trf.xlu0
  %v340 = vpop.trf.xlu0
  %v341 = vpop.trf.xlu0
  %v342 = vpop.trf.xlu0
  %v343 = vpop.trf.xlu0
  %v344 = vpop.trf.xlu0
  %v345 = vpop.trf.xlu0
  %v346 = vpop.trf.xlu0
  %v347 = vpop.trf.xlu0
  %v348 = vpop.trf.xlu0
  %v349 = vpop.trf.xlu0
  %v350 = vpop.trf.xlu0
  %v351 = vpop.trf.xlu0
  %v352 = vpop.trf.xlu0
  %vm353 = vcmask 916480
  %v355 = vsel %vm353, %v241, 0
  %v358 = vsel %vm353, %v242, 0
  %v361 = vsel %vm353, %v243, 0
  %v364 = vsel %vm353, %v244, 0
  %v367 = vsel %vm353, %v245, 0
  %v370 = vsel %vm353, %v246, 0
  %v373 = vsel %vm353, %v247, 0
  %v376 = vsel %vm353, %v248, 0
  %v379 = vsel %vm353, %v249, 0
  %v382 = vsel %vm353, %v250, 0
  %v385 = vsel %vm353, %v251, 0
  %v388 = vsel %vm353, %v252, 0
  %v391 = vsel %vm353, %v253, 0
  %v394 = vsel %vm353, %v254, 0
  %v397 = vsel %vm353, %v255, 0
  %v400 = vsel %vm353, %v256, 0
  %v403 = vsel %vm353, %v273, 0
  %v406 = vsel %vm353, %v274, 0
  %v409 = vsel %vm353, %v275, 0
  %v412 = vsel %vm353, %v276, 0
  %v415 = vsel %vm353, %v277, 0
  %v418 = vsel %vm353, %v278, 0
  %v421 = vsel %vm353, %v279, 0
  %v424 = vsel %vm353, %v280, 0
  %v427 = vsel %vm353, %v281, 0
  %v430 = vsel %vm353, %v282, 0
  %v433 = vsel %vm353, %v283, 0
  %v436 = vsel %vm353, %v284, 0
  %v439 = vsel %vm353, %v285, 0
  %v442 = vsel %vm353, %v286, 0
  %v445 = vsel %vm353, %v287, 0
  %v448 = vsel %vm353, %v288, 0
  %v451 = vsel %vm353, %v305, 0
  %v454 = vsel %vm353, %v306, 0
  %v457 = vsel %vm353, %v307, 0
  %v460 = vsel %vm353, %v308, 0
  %v463 = vsel %vm353, %v309, 0
  %v466 = vsel %vm353, %v310, 0
  %v469 = vsel %vm353, %v311, 0
  %v472 = vsel %vm353, %v312, 0
  %v475 = vsel %vm353, %v313, 0
  %v478 = vsel %vm353, %v314, 0
  %v481 = vsel %vm353, %v315, 0
  %v484 = vsel %vm353, %v316, 0
  %v487 = vsel %vm353, %v317, 0
  %v490 = vsel %vm353, %v318, 0
  %v493 = vsel %vm353, %v319, 0
  %v496 = vsel %vm353, %v320, 0
  %v499 = vsel %vm353, %v337, 0
  %v502 = vsel %vm353, %v338, 0
  %v505 = vsel %vm353, %v339, 0
  %v508 = vsel %vm353, %v340, 0
  %v511 = vsel %vm353, %v341, 0
  %v514 = vsel %vm353, %v342, 0
  %v517 = vsel %vm353, %v343, 0
  %v520 = vsel %vm353, %v344, 0
  %v523 = vsel %vm353, %v345, 0
  %v526 = vsel %vm353, %v346, 0
  %v529 = vsel %vm353, %v347, 0
  %v532 = vsel %vm353, %v348, 0
  %v535 = vsel %vm353, %v349, 0
  %v538 = vsel %vm353, %v350, 0
  %v541 = vsel %vm353, %v351, 0
  %v544 = vsel %vm353, %v352, 0
  %546 = vmatprep.subr.mxu0 0.0
  %547 = vmatpush1.msra.mxu0 %v211
  %548 = vmatprep.subr.mxu0 0.0
  %549 = vmatpush1.msra.mxu0 %v212
  %550 = vmatprep.subr.mxu0 0.0
  %551 = vmatpush1.msra.mxu0 %v213
  %552 = vmatprep.subr.mxu0 0.0
  %553 = vmatpush1.msra.mxu0 %v214
  %554 = vmatprep.subr.mxu0 0.0
  %555 = vmatpush1.msra.mxu0 %v215
  %556 = vmatprep.subr.mxu0 0.0
  %557 = vmatpush1.msra.mxu0 %v216
  %558 = vmatprep.subr.mxu0 0.0
  %559 = vmatpush1.msra.mxu0 %v217
  %560 = vmatprep.subr.mxu0 0.0
  %561 = vmatpush1.msra.mxu0 %v218
  %562 = vmatprep.subr.mxu0 0.0
  %563 = vmatpush1.msra.mxu0 %v219
  %564 = vmatprep.subr.mxu0 0.0
  %565 = vmatpush1.msra.mxu0 %v220
  %566 = vmatprep.subr.mxu0 0.0
  %567 = vmatpush1.msra.mxu0 %v221
  %568 = vmatprep.subr.mxu0 0.0
  %569 = vmatpush1.msra.mxu0 %v222
  %570 = vmatprep.subr.mxu0 0.0
  %571 = vmatpush1.msra.mxu0 %v223
  %572 = vmatprep.subr.mxu0 0.0
  %573 = vmatpush1.msra.mxu0 %v224
  %574 = vmatprep.subr.mxu0 0.0
  %575 = vmatpush1.msra.mxu0 0.0
  %576 = vmatprep.subr.mxu0 0.0
  %577 = vmatpush1.msra.mxu0 0.0
  %578 = vmatprep.subr.mxu0 0.0
  %579 = vmatpush1.msra.mxu0 0.0
  %580 = vmatprep.subr.mxu0 0.0
  %581 = vmatpush1.msra.mxu0 0.0
  %582 = vmatprep.subr.mxu0 0.0
  %583 = vmatpush1.msra.mxu0 0.0
  %584 = vmatprep.subr.mxu0 0.0
  %585 = vmatpush1.msra.mxu0 0.0
  %586 = vmatprep.subr.mxu0 0.0
  %587 = vmatpush1.msra.mxu0 0.0
  %588 = vmatprep.subr.mxu0 0.0
  %589 = vmatpush1.msra.mxu0 0.0
  %590 = vmatprep.subr.mxu0 0.0
  %591 = vmatpush1.msra.mxu0 0.0
  %592 = vmatprep.subr.mxu0 0.0
  %593 = vmatpush1.msra.mxu0 0.0
  %594 = vmatprep.subr.mxu0 0.0
  %595 = vmatpush1.msra.mxu0 0.0
  %596 = vmatprep.subr.mxu0 0.0
  %597 = vmatpush1.msra.mxu0 0.0
  %598 = vmatprep.subr.mxu0 0.0
  %599 = vmatpush1.msra.mxu0 0.0
  %600 = vmatprep.subr.mxu0 0.0
  %601 = vmatpush1.msra.mxu0 0.0
  %602 = vmatprep.subr.mxu0 0.0
  %603 = vmatpush1.msra.mxu0 0.0
  %604 = vmatprep.subr.mxu0 0.0
  %605 = vmatpush1.msra.mxu0 0.0
  %606 = vmatprep.subr.mxu0 0.0
  %607 = vmatpush1.msra.mxu0 0.0
  %608 = vmatprep.subr.mxu0 0.0
  %609 = vmatpush1.msra.mxu0 0.0
  %610 = vmatprep.mubr.f32.mxu0 0.0
  %611 = vmatmul.mubr.f32.gmra.mrb[0].mxu0 %v355
  %v612 = vpop.f32.mrb[0].mxu0
  %v613 = vadd.f32 0.0, %v612
  %v614 = vpop.f32.mrb[0].mxu0
  %615 = vmatprep.mubr.f32.mxu0 0.0
  %616 = vmatmul.mubr.f32.gmra.mrb[0].mxu0 %v358
  %v617 = vpop.f32.mrb[0].mxu0
  %v618 = vadd.f32 0.0, %v617
  %v619 = vpop.f32.mrb[0].mxu0
  %620 = vmatprep.mubr.f32.mxu0 0.0
  %621 = vmatmul.mubr.f32.gmra.mrb[0].mxu0 %v361
  %v622 = vpop.f32.mrb[0].mxu0
  %v623 = vadd.f32 0.0, %v622
  %v624 = vpop.f32.mrb[0].mxu0
  %625 = vmatprep.mubr.f32.mxu0 0.0
  %626 = vmatmul.mubr.f32.gmra.mrb[0].mxu0 %v364
  %v627 = vpop.f32.mrb[0].mxu0
  %v628 = vadd.f32 0.0, %v627
  %v629 = vpop.f32.mrb[0].mxu0
  %630 = vmatprep.mubr.f32.mxu0 0.0
  %631 = vmatmul.mubr.f32.gmra.mrb[0].mxu0 %v367
  %v632 = vpop.f32.mrb[0].mxu0
  %v633 = vadd.f32 0.0, %v632
  %v634 = vpop.f32.mrb[0].mxu0
  %635 = vmatprep.mubr.f32.mxu0 0.0
  %636 = vmatmul.mubr.f32.gmra.mrb[0].mxu0 %v370
  %v637 = vpop.f32.mrb[0].mxu0
  %v638 = vadd.f32 0.0, %v637
  %v639 = vpop.f32.mrb[0].mxu0
  %640 = vmatprep.mubr.f32.mxu0 0.0
  %641 = vmatmul.mubr.f32.gmra.mrb[0].mxu0 %v373
  %v642 = vpop.f32.mrb[0].mxu0
  %v643 = vadd.f32 0.0, %v642
  %v644 = vpop.f32.mrb[0].mxu0
  %645 = vmatprep.mubr.f32.mxu0 0.0
  %646 = vmatmul.mubr.f32.gmra.mrb[0].mxu0 %v376
  %v647 = vpop.f32.mrb[0].mxu0
  %v648 = vadd.f32 0.0, %v647
  %v649 = vpop.f32.mrb[0].mxu0
  %650 = vmatprep.mubr.f32.mxu0 0.0
  %651 = vmatmul.mubr.f32.gmra.mrb[0].mxu0 %v379
  %v652 = vpop.f32.mrb[0].mxu0
  %v653 = vadd.f32 0.0, %v652
  %v654 = vpop.f32.mrb[0].mxu0
  %655 = vmatprep.mubr.f32.mxu0 0.0
  %656 = vmatmul.mubr.f32.gmra.mrb[0].mxu0 %v382
  %v657 = vpop.f32.mrb[0].mxu0
  %v658 = vadd.f32 0.0, %v657
  %v659 = vpop.f32.mrb[0].mxu0
  %660 = vmatprep.mubr.f32.mxu0 0.0
  %661 = vmatmul.mubr.f32.gmra.mrb[0].mxu0 %v385
  %v662 = vpop.f32.mrb[0].mxu0
  %v663 = vadd.f32 0.0, %v662
  %v664 = vpop.f32.mrb[0].mxu0
  %665 = vmatprep.mubr.f32.mxu0 0.0
  %666 = vmatmul.mubr.f32.gmra.mrb[0].mxu0 %v388
  %v667 = vpop.f32.mrb[0].mxu0
  %v668 = vadd.f32 0.0, %v667
  %v669 = vpop.f32.mrb[0].mxu0
  %670 = vmatprep.mubr.f32.mxu0 0.0
  %671 = vmatmul.mubr.f32.gmra.mrb[0].mxu0 %v391
  %v672 = vpop.f32.mrb[0].mxu0
  %v673 = vadd.f32 0.0, %v672
  %v674 = vpop.f32.mrb[0].mxu0
  %675 = vmatprep.mubr.f32.mxu0 0.0
  %676 = vmatmul.mubr.f32.gmra.mrb[0].mxu0 %v394
  %v677 = vpop.f32.mrb[0].mxu0
  %v678 = vadd.f32 0.0, %v677
  %v679 = vpop.f32.mrb[0].mxu0
  %680 = vmatprep.mubr.f32.mxu0 0.0
  %681 = vmatmul.mubr.f32.gmra.mrb[0].mxu0 %v397
  %v682 = vpop.f32.mrb[0].mxu0
  %v683 = vadd.f32 0.0, %v682
  %v684 = vpop.f32.mrb[0].mxu0
  %685 = vmatprep.mubr.f32.mxu0 0.0
  %686 = vmatmul.mubr.f32.gmra.mrb[0].mxu0 %v400
  %v687 = vpop.f32.mrb[0].mxu0
  %v688 = vadd.f32 0.0, %v687
  %v689 = vpop.f32.mrb[0].mxu0
  %690 = vmatprep.mubr.f32.mxu0 0.0
  %691 = vmatmul.mubr.f32.gmra.mrb[0].mxu0 %v403
  %v692 = vpop.f32.mrb[0].mxu0
  %v693 = vadd.f32 0.0, %v692
  %v694 = vpop.f32.mrb[0].mxu0
  %695 = vmatprep.mubr.f32.mxu0 0.0
  %696 = vmatmul.mubr.f32.gmra.mrb[0].mxu0 %v406
  %v697 = vpop.f32.mrb[0].mxu0
  %v698 = vadd.f32 0.0, %v697
  %v699 = vpop.f32.mrb[0].mxu0
  %700 = vmatprep.mubr.f32.mxu0 0.0
  %701 = vmatmul.mubr.f32.gmra.mrb[0].mxu0 %v409
  %v702 = vpop.f32.mrb[0].mxu0
  %v703 = vadd.f32 0.0, %v702
  %v704 = vpop.f32.mrb[0].mxu0
  %705 = vmatprep.mubr.f32.mxu0 0.0
  %706 = vmatmul.mubr.f32.gmra.mrb[0].mxu0 %v412
  %v707 = vpop.f32.mrb[0].mxu0
  %v708 = vadd.f32 0.0, %v707
  %v709 = vpop.f32.mrb[0].mxu0
  %710 = vmatprep.mubr.f32.mxu0 0.0
  %711 = vmatmul.mubr.f32.gmra.mrb[0].mxu0 %v415
  %v712 = vpop.f32.mrb[0].mxu0
  %v713 = vadd.f32 0.0, %v712
  %v714 = vpop.f32.mrb[0].mxu0
  %715 = vmatprep.mubr.f32.mxu0 0.0
  %716 = vmatmul.mubr.f32.gmra.mrb[0].mxu0 %v418
  %v717 = vpop.f32.mrb[0].mxu0
  %v718 = vadd.f32 0.0, %v717
  %v719 = vpop.f32.mrb[0].mxu0
  %720 = vmatprep.mubr.f32.mxu0 0.0
  %721 = vmatmul.mubr.f32.gmra.mrb[0].mxu0 %v421
  %v722 = vpop.f32.mrb[0].mxu0
  %v723 = vadd.f32 0.0, %v722
  %v724 = vpop.f32.mrb[0].mxu0
  %725 = vmatprep.mubr.f32.mxu0 0.0
  %726 = vmatmul.mubr.f32.gmra.mrb[0].mxu0 %v424
  %v727 = vpop.f32.mrb[0].mxu0
  %v728 = vadd.f32 0.0, %v727
  %v729 = vpop.f32.mrb[0].mxu0
  %730 = vmatprep.mubr.f32.mxu0 0.0
  %731 = vmatmul.mubr.f32.gmra.mrb[0].mxu0 %v427
  %v732 = vpop.f32.mrb[0].mxu0
  %v733 = vadd.f32 0.0, %v732
  %v734 = vpop.f32.mrb[0].mxu0
  %735 = vmatprep.mubr.f32.mxu0 0.0
  %736 = vmatmul.mubr.f32.gmra.mrb[0].mxu0 %v430
  %v737 = vpop.f32.mrb[0].mxu0
  %v738 = vadd.f32 0.0, %v737
  %v739 = vpop.f32.mrb[0].mxu0
  %740 = vmatprep.mubr.f32.mxu0 0.0
  %741 = vmatmul.mubr.f32.gmra.mrb[0].mxu0 %v433
  %v742 = vpop.f32.mrb[0].mxu0
  %v743 = vadd.f32 0.0, %v742
  %v744 = vpop.f32.mrb[0].mxu0
  %745 = vmatprep.mubr.f32.mxu0 0.0
  %746 = vmatmul.mubr.f32.gmra.mrb[0].mxu0 %v436
  %v747 = vpop.f32.mrb[0].mxu0
  %v748 = vadd.f32 0.0, %v747
  %v749 = vpop.f32.mrb[0].mxu0
  %750 = vmatprep.mubr.f32.mxu0 0.0
  %751 = vmatmul.mubr.f32.gmra.mrb[0].mxu0 %v439
  %v752 = vpop.f32.mrb[0].mxu0
  %v753 = vadd.f32 0.0, %v752
  %v754 = vpop.f32.mrb[0].mxu0
  %755 = vmatprep.mubr.f32.mxu0 0.0
  %756 = vmatmul.mubr.f32.gmra.mrb[0].mxu0 %v442
  %v757 = vpop.f32.mrb[0].mxu0
  %v758 = vadd.f32 0.0, %v757
  %v759 = vpop.f32.mrb[0].mxu0
  %760 = vmatprep.mubr.f32.mxu0 0.0
  %761 = vmatmul.mubr.f32.gmra.mrb[0].mxu0 %v445
  %v762 = vpop.f32.mrb[0].mxu0
  %v763 = vadd.f32 0.0, %v762
  %v764 = vpop.f32.mrb[0].mxu0
  %765 = vmatprep.mubr.f32.mxu0 0.0
  %766 = vmatmul.mubr.f32.gmra.mrb[0].mxu0 %v448
  %v767 = vpop.f32.mrb[0].mxu0
  %v768 = vadd.f32 0.0, %v767
  %v769 = vpop.f32.mrb[0].mxu0
  %770 = vmatprep.mubr.f32.mxu0 0.0
  %771 = vmatmul.mubr.f32.gmra.mrb[0].mxu0 %v451
  %v772 = vpop.f32.mrb[0].mxu0
  %v773 = vadd.f32 0.0, %v772
  %v774 = vpop.f32.mrb[0].mxu0
  %775 = vmatprep.mubr.f32.mxu0 0.0
  %776 = vmatmul.mubr.f32.gmra.mrb[0].mxu0 %v454
  %v777 = vpop.f32.mrb[0].mxu0
  %v778 = vadd.f32 0.0, %v777
  %v779 = vpop.f32.mrb[0].mxu0
  %780 = vmatprep.mubr.f32.mxu0 0.0
  %781 = vmatmul.mubr.f32.gmra.mrb[0].mxu0 %v457
  %v782 = vpop.f32.mrb[0].mxu0
  %v783 = vadd.f32 0.0, %v782
  %v784 = vpop.f32.mrb[0].mxu0
  %785 = vmatprep.mubr.f32.mxu0 0.0
  %786 = vmatmul.mubr.f32.gmra.mrb[0].mxu0 %v460
  %v787 = vpop.f32.mrb[0].mxu0
  %v788 = vadd.f32 0.0, %v787
  %v789 = vpop.f32.mrb[0].mxu0
  %790 = vmatprep.mubr.f32.mxu0 0.0
  %791 = vmatmul.mubr.f32.gmra.mrb[0].mxu0 %v463
  %v792 = vpop.f32.mrb[0].mxu0
  %v793 = vadd.f32 0.0, %v792
  %v794 = vpop.f32.mrb[0].mxu0
  %795 = vmatprep.mubr.f32.mxu0 0.0
  %796 = vmatmul.mubr.f32.gmra.mrb[0].mxu0 %v466
  %v797 = vpop.f32.mrb[0].mxu0
  %v798 = vadd.f32 0.0, %v797
  %v799 = vpop.f32.mrb[0].mxu0
  %800 = vmatprep.mubr.f32.mxu0 0.0
  %801 = vmatmul.mubr.f32.gmra.mrb[0].mxu0 %v469
  %v802 = vpop.f32.mrb[0].mxu0
  %v803 = vadd.f32 0.0, %v802
  %v804 = vpop.f32.mrb[0].mxu0
  %805 = vmatprep.mubr.f32.mxu0 0.0
  %806 = vmatmul.mubr.f32.gmra.mrb[0].mxu0 %v472
  %v807 = vpop.f32.mrb[0].mxu0
  %v808 = vadd.f32 0.0, %v807
  %v809 = vpop.f32.mrb[0].mxu0
  %810 = vmatprep.mubr.f32.mxu0 0.0
  %811 = vmatmul.mubr.f32.gmra.mrb[0].mxu0 %v475
  %v812 = vpop.f32.mrb[0].mxu0
  %v813 = vadd.f32 0.0, %v812
  %v814 = vpop.f32.mrb[0].mxu0
  %815 = vmatprep.mubr.f32.mxu0 0.0
  %816 = vmatmul.mubr.f32.gmra.mrb[0].mxu0 %v478
  %v817 = vpop.f32.mrb[0].mxu0
  %v818 = vadd.f32 0.0, %v817
  %v819 = vpop.f32.mrb[0].mxu0
  %820 = vmatprep.mubr.f32.mxu0 0.0
  %821 = vmatmul.mubr.f32.gmra.mrb[0].mxu0 %v481
  %v822 = vpop.f32.mrb[0].mxu0
  %v823 = vadd.f32 0.0, %v822
  %v824 = vpop.f32.mrb[0].mxu0
  %825 = vmatprep.mubr.f32.mxu0 0.0
  %826 = vmatmul.mubr.f32.gmra.mrb[0].mxu0 %v484
  %v827 = vpop.f32.mrb[0].mxu0
  %v828 = vadd.f32 0.0, %v827
  %v829 = vpop.f32.mrb[0].mxu0
  %830 = vmatprep.mubr.f32.mxu0 0.0
  %831 = vmatmul.mubr.f32.gmra.mrb[0].mxu0 %v487
  %v832 = vpop.f32.mrb[0].mxu0
  %v833 = vadd.f32 0.0, %v832
  %v834 = vpop.f32.mrb[0].mxu0
  %835 = vmatprep.mubr.f32.mxu0 0.0
  %836 = vmatmul.mubr.f32.gmra.mrb[0].mxu0 %v490
  %v837 = vpop.f32.mrb[0].mxu0
  %v838 = vadd.f32 0.0, %v837
  %v839 = vpop.f32.mrb[0].mxu0
  %840 = vmatprep.mubr.f32.mxu0 0.0
  %841 = vmatmul.mubr.f32.gmra.mrb[0].mxu0 %v493
  %v842 = vpop.f32.mrb[0].mxu0
  %v843 = vadd.f32 0.0, %v842
  %v844 = vpop.f32.mrb[0].mxu0
  %845 = vmatprep.mubr.f32.mxu0 0.0
  %846 = vmatmul.mubr.f32.gmra.mrb[0].mxu0 %v496
  %v847 = vpop.f32.mrb[0].mxu0
  %v848 = vadd.f32 0.0, %v847
  %v849 = vpop.f32.mrb[0].mxu0
  %850 = vmatprep.mubr.f32.mxu0 0.0
  %851 = vmatmul.mubr.f32.gmra.mrb[0].mxu0 %v499
  %v852 = vpop.f32.mrb[0].mxu0
  %v853 = vadd.f32 0.0, %v852
  %v854 = vpop.f32.mrb[0].mxu0
  %855 = vmatprep.mubr.f32.mxu0 0.0
  %856 = vmatmul.mubr.f32.gmra.mrb[0].mxu0 %v502
  %v857 = vpop.f32.mrb[0].mxu0
  %v858 = vadd.f32 0.0, %v857
  %v859 = vpop.f32.mrb[0].mxu0
  %860 = vmatprep.mubr.f32.mxu0 0.0
  %861 = vmatmul.mubr.f32.gmra.mrb[0].mxu0 %v505
  %v862 = vpop.f32.mrb[0].mxu0
  %v863 = vadd.f32 0.0, %v862
  %v864 = vpop.f32.mrb[0].mxu0
  %865 = vmatprep.mubr.f32.mxu0 0.0
  %866 = vmatmul.mubr.f32.gmra.mrb[0].mxu0 %v508
  %v867 = vpop.f32.mrb[0].mxu0
  %v868 = vadd.f32 0.0, %v867
  %v869 = vpop.f32.mrb[0].mxu0
  %870 = vmatprep.mubr.f32.mxu0 0.0
  %871 = vmatmul.mubr.f32.gmra.mrb[0].mxu0 %v511
  %v872 = vpop.f32.mrb[0].mxu0
  %v873 = vadd.f32 0.0, %v872
  %v874 = vpop.f32.mrb[0].mxu0
  %875 = vmatprep.mubr.f32.mxu0 0.0
  %876 = vmatmul.mubr.f32.gmra.mrb[0].mxu0 %v514
  %v877 = vpop.f32.mrb[0].mxu0
  %v878 = vadd.f32 0.0, %v877
  %v879 = vpop.f32.mrb[0].mxu0
  %880 = vmatprep.mubr.f32.mxu0 0.0
  %881 = vmatmul.mubr.f32.gmra.mrb[0].mxu0 %v517
  %v882 = vpop.f32.mrb[0].mxu0
  %v883 = vadd.f32 0.0, %v882
  %v884 = vpop.f32.mrb[0].mxu0
  %885 = vmatprep.mubr.f32.mxu0 0.0
  %886 = vmatmul.mubr.f32.gmra.mrb[0].mxu0 %v520
  %v887 = vpop.f32.mrb[0].mxu0
  %v888 = vadd.f32 0.0, %v887
  %v889 = vpop.f32.mrb[0].mxu0
  %890 = vmatprep.mubr.f32.mxu0 0.0
  %891 = vmatmul.mubr.f32.gmra.mrb[0].mxu0 %v523
  %v892 = vpop.f32.mrb[0].mxu0
  %v893 = vadd.f32 0.0, %v892
  %v894 = vpop.f32.mrb[0].mxu0
  %895 = vmatprep.mubr.f32.mxu0 0.0
  %896 = vmatmul.mubr.f32.gmra.mrb[0].mxu0 %v526
  %v897 = vpop.f32.mrb[0].mxu0
  %v898 = vadd.f32 0.0, %v897
  %v899 = vpop.f32.mrb[0].mxu0
  %900 = vmatprep.mubr.f32.mxu0 0.0
  %901 = vmatmul.mubr.f32.gmra.mrb[0].mxu0 %v529
  %v902 = vpop.f32.mrb[0].mxu0
  %v903 = vadd.f32 0.0, %v902
  %v904 = vpop.f32.mrb[0].mxu0
  %905 = vmatprep.mubr.f32.mxu0 0.0
  %906 = vmatmul.mubr.f32.gmra.mrb[0].mxu0 %v532
  %v907 = vpop.f32.mrb[0].mxu0
  %v908 = vadd.f32 0.0, %v907
  %v909 = vpop.f32.mrb[0].mxu0
  %910 = vmatprep.mubr.f32.mxu0 0.0
  %911 = vmatmul.mubr.f32.gmra.mrb[0].mxu0 %v535
  %v912 = vpop.f32.mrb[0].mxu0
  %v913 = vadd.f32 0.0, %v912
  %v914 = vpop.f32.mrb[0].mxu0
  %915 = vmatprep.mubr.f32.mxu0 0.0
  %916 = vmatmul.mubr.f32.gmra.mrb[0].mxu0 %v538
  %v917 = vpop.f32.mrb[0].mxu0
  %v918 = vadd.f32 0.0, %v917
  %v919 = vpop.f32.mrb[0].mxu0
  %920 = vmatprep.mubr.f32.mxu0 0.0
  %921 = vmatmul.mubr.f32.gmra.mrb[0].mxu0 %v541
  %v922 = vpop.f32.mrb[0].mxu0
  %v923 = vadd.f32 0.0, %v922
  %v924 = vpop.f32.mrb[0].mxu0
  %925 = vmatprep.mubr.f32.mxu0 0.0
  %926 = vmatmul.mubr.f32.gmra.mrb[0].mxu0 %v544
  %v927 = vpop.f32.mrb[0].mxu0
  %v928 = vadd.f32 0.0, %v927
  %v929 = vpop.f32.mrb[0].mxu0
  %930 = vdwg.mxu0
  %vm931 = vcmask 261120
  %932 = vst.msk [vmem:[%s2] sm:$0xff] %vm931, %v613
  %933 = vst.msk [vmem:[%s2 + $0x8] sm:$0xff] %vm931, %v618
  %934 = vst.msk [vmem:[%s2 + $0x10] sm:$0xff] %vm931, %v623
  %935 = vst.msk [vmem:[%s2 + $0x18] sm:$0xff] %vm931, %v628
  %936 = vst.msk [vmem:[%s2 + $0x20] sm:$0xff] %vm931, %v633
  %937 = vst.msk [vmem:[%s2 + $0x28] sm:$0xff] %vm931, %v638
  %938 = vst.msk [vmem:[%s2 + $0x30] sm:$0xff] %vm931, %v643
  %939 = vst.msk [vmem:[%s2 + $0x38] sm:$0xff] %vm931, %v648
  %940 = vst.msk [vmem:[%s2 + $0x40] sm:$0xff] %vm931, %v653
  %941 = vst.msk [vmem:[%s2 + $0x48] sm:$0xff] %vm931, %v658
  %942 = vst.msk [vmem:[%s2 + $0x50] sm:$0xff] %vm931, %v663
  %943 = vst.msk [vmem:[%s2 + $0x58] sm:$0xff] %vm931, %v668
  %944 = vst.msk [vmem:[%s2 + $0x60] sm:$0xff] %vm931, %v673
  %945 = vst.msk [vmem:[%s2 + $0x68] sm:$0xff] %vm931, %v678
  %946 = vst.msk [vmem:[%s2 + $0x70] sm:$0xff] %vm931, %v683
  %947 = vst.msk [vmem:[%s2 + $0x78] sm:$0xff] %vm931, %v688
  %948 = vst.msk [vmem:[%s2 + $0x80] sm:$0xff] %vm931, %v693
  %949 = vst.msk [vmem:[%s2 + $0x88] sm:$0xff] %vm931, %v698
  %950 = vst.msk [vmem:[%s2 + $0x90] sm:$0xff] %vm931, %v703
  %951 = vst.msk [vmem:[%s2 + $0x98] sm:$0xff] %vm931, %v708
  %952 = vst.msk [vmem:[%s2 + $0xa0] sm:$0xff] %vm931, %v713
  %953 = vst.msk [vmem:[%s2 + $0xa8] sm:$0xff] %vm931, %v718
  %954 = vst.msk [vmem:[%s2 + $0xb0] sm:$0xff] %vm931, %v723
  %955 = vst.msk [vmem:[%s2 + $0xb8] sm:$0xff] %vm931, %v728
  %956 = vst.msk [vmem:[%s2 + $0xc0] sm:$0xff] %vm931, %v733
  %957 = vst.msk [vmem:[%s2 + $0xc8] sm:$0xff] %vm931, %v738
  %958 = vst.msk [vmem:[%s2 + $0xd0] sm:$0xff] %vm931, %v743
  %959 = vst.msk [vmem:[%s2 + $0xd8] sm:$0xff] %vm931, %v748
  %960 = vst.msk [vmem:[%s2 + $0xe0] sm:$0xff] %vm931, %v753
  %961 = vst.msk [vmem:[%s2 + $0xe8] sm:$0xff] %vm931, %v758
  %962 = vst.msk [vmem:[%s2 + $0xf0] sm:$0xff] %vm931, %v763
  %963 = vst.msk [vmem:[%s2 + $0xf8] sm:$0xff] %vm931, %v768
  %964 = vst.msk [vmem:[%s2 + $0x100] sm:$0xff] %vm931, %v773
  %965 = vst.msk [vmem:[%s2 + $0x108] sm:$0xff] %vm931, %v778
  %966 = vst.msk [vmem:[%s2 + $0x110] sm:$0xff] %vm931, %v783
  %967 = vst.msk [vmem:[%s2 + $0x118] sm:$0xff] %vm931, %v788
  %968 = vst.msk [vmem:[%s2 + $0x120] sm:$0xff] %vm931, %v793
  %969 = vst.msk [vmem:[%s2 + $0x128] sm:$0xff] %vm931, %v798
  %970 = vst.msk [vmem:[%s2 + $0x130] sm:$0xff] %vm931, %v803
  %971 = vst.msk [vmem:[%s2 + $0x138] sm:$0xff] %vm931, %v808
  %972 = vst.msk [vmem:[%s2 + $0x140] sm:$0xff] %vm931, %v813
  %973 = vst.msk [vmem:[%s2 + $0x148] sm:$0xff] %vm931, %v818
  %974 = vst.msk [vmem:[%s2 + $0x150] sm:$0xff] %vm931, %v823
  %975 = vst.msk [vmem:[%s2 + $0x158] sm:$0xff] %vm931, %v828
  %976 = vst.msk [vmem:[%s2 + $0x160] sm:$0xff] %vm931, %v833
  %977 = vst.msk [vmem:[%s2 + $0x168] sm:$0xff] %vm931, %v838
  %978 = vst.msk [vmem:[%s2 + $0x170] sm:$0xff] %vm931, %v843
  %979 = vst.msk [vmem:[%s2 + $0x178] sm:$0xff] %vm931, %v848
  %980 = vst.msk [vmem:[%s2 + $0x180] sm:$0xff] %vm931, %v853
  %981 = vst.msk [vmem:[%s2 + $0x188] sm:$0xff] %vm931, %v858
  %982 = vst.msk [vmem:[%s2 + $0x190] sm:$0xff] %vm931, %v863
  %983 = vst.msk [vmem:[%s2 + $0x198] sm:$0xff] %vm931, %v868
  %984 = vst.msk [vmem:[%s2 + $0x1a0] sm:$0xff] %vm931, %v873
  %985 = vst.msk [vmem:[%s2 + $0x1a8] sm:$0xff] %vm931, %v878
  %986 = vst.msk [vmem:[%s2 + $0x1b0] sm:$0xff] %vm931, %v883
  %987 = vst.msk [vmem:[%s2 + $0x1b8] sm:$0xff] %vm931, %v888
  %988 = vst.msk [vmem:[%s2 + $0x1c0] sm:$0xff] %vm931, %v893
  %989 = vst.msk [vmem:[%s2 + $0x1c8] sm:$0xff] %vm931, %v898
  %990 = vst.msk [vmem:[%s2 + $0x1d0] sm:$0xff] %vm931, %v903
  %991 = vst.msk [vmem:[%s2 + $0x1d8] sm:$0xff] %vm931, %v908
  %992 = vst.msk [vmem:[%s2 + $0x1e0] sm:$0xff] %vm931, %v913
  %993 = vst.msk [vmem:[%s2 + $0x1e8] sm:$0xff] %vm931, %v918
  %994 = vst.msk [vmem:[%s2 + $0x1f0] sm:$0xff] %vm931, %v923
  %995 = vst.msk [vmem:[%s2 + $0x1f8] sm:$0xff] %vm931, %v928
  // Predicated region
  $region10: #{tpu_custom_call.1} parent=0 // pred_check
    _
  $region11: #{tpu_custom_call.1} parent=0 // pred_check_branch
    %997 = sbr.rel (0) target = $region13
  $region12: #{tpu_custom_call.1} parent=0 // pred_region
    _
  $region13: #{tpu_custom_call.1} parent=0 // pred_fallthru
    _
  // Predicated region
  $region14: #{tpu_custom_call.1} parent=0 // pred_check
    _
  $region15: #{tpu_custom_call.1} parent=0 // pred_check_branch
    %999 = sbr.rel (0) target = $region17
  $region16: #{tpu_custom_call.1} parent=0 // pred_region
    _
  $region17: #{tpu_custom_call.1} parent=0 // pred_fallthru
    _

</llo_original>
